<compile_context>
chip_gen: v6e
topology: v6e:2x2x1
jax: 0.10.0
libtpu: 0.0.40
codegen_flags: <defaults>
</compile_context>

<pallas_src>
import jax
import jax.numpy as jnp
from jax.experimental import pallas as pl
from jax.experimental.pallas import tpu as pltpu


def _round_up(v, m):
    return ((v + m - 1) // m) * m


def _vmem_capacity_bytes():
    """Physical VMEM per core; conservative 64 MiB (v7x) fallback."""
    try:
        info = pltpu.get_tpu_info()
        cap = int(getattr(info, "vmem_capacity_bytes", 0) or 0)
        if cap > 0:
            return cap
    except Exception:
        pass
    return 64 * 1024 * 1024


def make_rnn_kernel(time_chunk, seq_len, need_mask, n_chains, unroll):
    """Build the kernel as a closure over static chunking parameters."""

    def rnn_kernel(x_ref, wx_ref, bxh_ref, wh_ref, wfc_ref, bfc_ref,
                   out_ref, h_scratch, xp_scratch):
        t_chunk = pl.program_id(1)          # time-chunk index (serial axis)

        @pl.when(t_chunk == 0)
        def _():
            h_scratch[...] = jnp.zeros_like(h_scratch)

        tc, bc, in_p = x_ref.shape
        hid_p = wh_ref.shape[0]
        wdt = wx_ref.dtype                  # compute dtype for MXU operands

        # --- Hoisted, chunk-level input projection: one lane-dense GEMM for
        #     TC time steps, with (bx + bh) pre-folded into a single bias.
        #     Operands in weight dtype (bf16 default), f32 accumulation. ---
        x_flat = x_ref[...].reshape(tc * bc, in_p).astype(wdt)
        xp = (jnp.dot(x_flat, wx_ref[...], preferred_element_type=jnp.float32)
              + bxh_ref[...])
        xp_scratch[...] = xp.reshape(tc, bc, hid_p)

        wh = wh_ref[...]                     # hoist weight load out of the loop
        half = bc // n_chains

        def cell(xp_t, h_prev):
            return jnp.tanh(
                xp_t + jnp.dot(h_prev.astype(wdt), wh,
                               preferred_element_type=jnp.float32))

        def run_recurrence(masked):
            if n_chains == 1:
                def step(t, h_prev):
                    h_new = cell(xp_scratch[t], h_prev)
                    if masked:
                        gt = t_chunk * time_chunk + t
                        h_new = jnp.where(gt < seq_len, h_new, h_prev)
                    return h_new

                h_last = jax.lax.fori_loop(0, tc, step, h_scratch[...],
                                           unroll=unroll)
                h_scratch[...] = h_last
            else:
                # Two independent dependency chains (sub-batches) interleaved
                # to fill MXU/EUP pipeline gaps of the latency-bound recurrence.
                def step(t, carry):
                    ha, hb = carry
                    xp_t = xp_scratch[t]
                    na = cell(xp_t[0:half], ha)
                    nb = cell(xp_t[half:bc], hb)
                    if masked:
                        gt = t_chunk * time_chunk + t
                        keep = gt < seq_len
                        na = jnp.where(keep, na, ha)
                        nb = jnp.where(keep, nb, hb)
                    return na, nb

                h0a = h_scratch[pl.ds(0, half), :]
                h0b = h_scratch[pl.ds(half, half), :]
                ha, hb = jax.lax.fori_loop(0, tc, step, (h0a, h0b),
                                           unroll=unroll)
                h_scratch[pl.ds(0, half), :] = ha
                h_scratch[pl.ds(half, half), :] = hb

        if need_mask:
            # Only the last time chunk can contain padded timesteps; all other
            # chunks run the mask-free (cheaper) loop body.
            last = pl.num_programs(1) - 1

            @pl.when(t_chunk != last)
            def _():
                run_recurrence(False)

            @pl.when(t_chunk == last)
            def _():
                run_recurrence(True)
        else:
            run_recurrence(False)

        # --- Final Linear at the last time chunk (lane-dense padded output). ---
        @pl.when(t_chunk == pl.num_programs(1) - 1)
        def _():
            h_last = h_scratch[...]
            out_ref[...] = (
                jnp.dot(h_last.astype(wdt), wfc_ref[...],
                        preferred_element_type=jnp.float32)
                + bfc_ref[...]
            ).astype(out_ref.dtype)

    return rnn_kernel


def rnn_forward(x, params, *, time_chunk=None, weight_dtype=jnp.bfloat16):
    """x: (batch, seq, input_size) float32 (PyTorch layout). Returns (batch, output_size)."""
    wx, bx, wh, bh, wfc, bfc = params
    batch, seq, input_size = x.shape
    hidden = wx.shape[1]
    output_size = wfc.shape[1]

    phys_vmem = _vmem_capacity_bytes()
    big_vmem = phys_vmem >= (100 << 20)       # v5e/v6e (128 MiB) vs v7x (64 MiB)

    # ---- Padded, lane/sublane-dense shapes ----
    in_p = _round_up(input_size, 128)
    hid_p = _round_up(hidden, 128)
    out_p = _round_up(output_size, 128)

    # Batch blocking: always >= 2 blocks when possible so the "parallel" axis
    # can occupy both TensorCores (v7x) / megacore; cap 256 on big-VMEM parts.
    cap = 256 if big_vmem else 128
    b_p = _round_up(batch, 8)
    if b_p <= 8:
        bc = b_p
    else:
        n_blocks = max(2, -(-b_p // cap))
        bc = min(cap, _round_up(-(-b_p // n_blocks), 8))
        b_p = _round_up(b_p, bc)

    # Time chunking: larger on 128 MiB parts, shrunk if the per-chunk projection
    # scratch would eat too much VMEM (important on v7x's 64 MiB).
    if time_chunk is None:
        tc = 32 if big_vmem else 16
        while tc > 8 and tc * bc * hid_p * 4 > (8 << 20):
            tc //= 2
    else:
        tc = time_chunk
    tc = max(1, min(tc, seq))
    seq_p = _round_up(seq, tc)
    need_mask = seq_p != seq

    # Two interleaved sub-batch chains when the recurrence is latency-bound.
    n_chains = 2 if (bc >= 16 and bc % 16 == 0 and hid_p <= 256) else 1
    # Cap the unroll when the h tile is large (vreg pressure).
    unroll = True if bc * hid_p <= 32 * 1024 else 4

    # ---- Layout prep: time-major, zero-padded ----
    x_tm = jnp.transpose(x, (1, 0, 2))                     # (seq, batch, input)
    x_tm = jnp.pad(x_tm, ((0, seq_p - seq),
                          (0, b_p - batch),
                          (0, in_p - input_size)))

    wx_p = jnp.pad(wx, ((0, in_p - input_size), (0, hid_p - hidden))).astype(weight_dtype)
    wh_p = jnp.pad(wh, ((0, hid_p - hidden), (0, hid_p - hidden))).astype(weight_dtype)
    wfc_p = jnp.pad(wfc, ((0, hid_p - hidden), (0, out_p - output_size))).astype(weight_dtype)
    bxh_p = jnp.pad(bx + bh, ((0, hid_p - hidden),)).reshape(1, hid_p)   # folded bias (f32)
    bfc_p = jnp.pad(bfc, ((0, out_p - output_size),)).reshape(1, out_p)  # f32

    # ---- VMEM budget computed from the actual footprint ----
    wbytes = jnp.dtype(weight_dtype).itemsize
    resident = (in_p * hid_p + hid_p * hid_p + hid_p * out_p) * wbytes \
        + (hid_p + out_p) * 4
    need = (resident
            + 2 * tc * bc * in_p * 4          # double-buffered x block
            + tc * bc * hid_p * 4             # xp_scratch
            + bc * hid_p * 4                  # h_scratch
            + 2 * bc * out_p * 4)             # output block
    vmem_limit = int(need * 1.5) + (4 << 20)
    vmem_limit = max(vmem_limit, 32 << 20)
    vmem_limit = min(vmem_limit, int(phys_vmem * 3 // 4))

    grid = (b_p // bc, seq_p // tc)    # (parallel batch chunks, serial time chunks)

    kernel = make_rnn_kernel(tc, seq, need_mask, n_chains, unroll)

    # Time-invariant operands: whole-array VMEM residency (no double buffering).
    resident_spec = pl.BlockSpec(memory_space=pltpu.MemorySpace.VMEM)

    grid_spec = pltpu.PrefetchScalarGridSpec(
        num_scalar_prefetch=0,
        grid=grid,
        in_specs=[
            pl.BlockSpec((tc, bc, in_p), lambda b, t: (t, b, 0)),   # x time/batch chunk
            resident_spec,                                          # W_x  (in_p, hid_p)
            resident_spec,                                          # bx+bh (1, hid_p)
            resident_spec,                                          # W_h  (hid_p, hid_p)
            resident_spec,                                          # W_fc (hid_p, out_p)
            resident_spec,                                          # b_fc (1, out_p)
        ],
        out_specs=pl.BlockSpec((bc, out_p), lambda b, t: (b, 0)),
        scratch_shapes=[
            pltpu.VMEM((bc, hid_p), jnp.float32),        # h carried across time chunks
            pltpu.VMEM((tc, bc, hid_p), jnp.float32),    # per-chunk input projection
        ],
    )

    out_padded = pl.pallas_call(
        kernel,
        out_shape=jax.ShapeDtypeStruct((b_p, out_p), jnp.float32),
        grid_spec=grid_spec,
        compiler_params=pltpu.CompilerParams(
            dimension_semantics=("parallel", "arbitrary"),
            vmem_limit_bytes=vmem_limit,
        ),
    )(x_tm, wx_p, bxh_p, wh_p, wfc_p, bfc_p)

    return out_padded[:batch, :output_size]


def init_params(key, input_size, hidden_size, output_size):
    """Deterministic nn.Linear-style init. Weights returned pre-transposed to (in, out)."""
    ks = jax.random.split(key, 6)

    def linear(kw, kb, fan_in, fan_out):
        bound = 1.0 / jnp.sqrt(fan_in)
        w = jax.random.uniform(kw, (fan_in, fan_out), jnp.float32, -bound, bound)
        b = jax.random.uniform(kb, (fan_out,), jnp.float32, -bound, bound)
        return w, b

    wx, bx = linear(ks[0], ks[1], input_size, hidden_size)
    wh, bh = linear(ks[2], ks[3], hidden_size, hidden_size)
    wfc, bfc = linear(ks[4], ks[5], hidden_size, output_size)
    return (wx, bx, wh, bh, wfc, bfc)


def rnn_reference(x, params):
    """Pure-JAX reference of the PyTorch eval-mode forward."""
    wx, bx, wh, bh, wfc, bfc = params
    batch = x.shape[0]
    h = jnp.zeros((batch, wx.shape[1]), jnp.float32)
    for t in range(x.shape[1]):
        h = jnp.tanh(x[:, t, :] @ wx + bx + h @ wh + bh)
    return h @ wfc + bfc


if __name__ == "__main__":
    key = jax.random.PRNGKey(0)
    kx, kp, kx2, kp2 = jax.random.split(key, 4)

    # --- Test 1: small shapes, f32 weights (strict parity with the reference) ---
    batch, seq, input_size, hidden_size, output_size = 2, 8, 16, 32, 1
    x = jax.random.normal(kx, (batch, seq, input_size), jnp.float32)
    params = init_params(kp, input_size, hidden_size, output_size)

    ref = rnn_reference(x, params)

    out_f32 = jax.block_until_ready(rnn_forward(x, params, weight_dtype=jnp.float32))
    assert out_f32.shape == (batch, output_size)
    assert jnp.allclose(out_f32, ref, atol=1e-4, rtol=1e-4), (out_f32, ref)

    # --- Test 2: default bf16 weights (MXU-rate path), looser numeric tolerance ---
    out_bf16 = jax.block_until_ready(rnn_forward(x, params))
    assert out_bf16.shape == (batch, output_size)
    assert jnp.allclose(out_bf16, ref, atol=5e-2, rtol=5e-2), (out_bf16, ref)

    # --- Test 3: exercises padded timesteps (masked last chunk only), multiple
    #     batch blocks, and the 2-chain interleaved recurrence ---
    b2, s2, i2, h2, o2 = 20, 21, 24, 48, 3
    x2 = jax.random.normal(kx2, (b2, s2, i2), jnp.float32)
    params2 = init_params(kp2, i2, h2, o2)
    out2 = jax.block_until_ready(
        rnn_forward(x2, params2, time_chunk=16, weight_dtype=jnp.float32))
    ref2 = rnn_reference(x2, params2)
    assert out2.shape == (b2, o2)
    assert jnp.allclose(out2, ref2, atol=1e-3, rtol=1e-3), (out2, ref2)

    print("KERNEL_OK")
</pallas_src>

<mosaic_0001>
module attributes {stable_mosaic.version = 11 : i64} {
  func.func @rnn_kernel(%arg0: i32, %arg1: i32, %arg2: memref<8x8x128xf32, #tpu.memory_space<vmem>>, %arg3: memref<128x128xf32, #tpu.memory_space<vmem>>, %arg4: memref<1x128xf32, #tpu.memory_space<vmem>>, %arg5: memref<128x128xf32, #tpu.memory_space<vmem>>, %arg6: memref<128x128xf32, #tpu.memory_space<vmem>>, %arg7: memref<1x128xf32, #tpu.memory_space<vmem>>, %arg8: memref<8x128xf32, #tpu.memory_space<vmem>>, %arg9: memref<8x128xf32, #tpu.memory_space<vmem>>, %arg10: memref<8x8x128xf32, #tpu.memory_space<vmem>>) attributes {dimension_semantics = [#tpu.dimension_semantics<parallel>, #tpu.dimension_semantics<arbitrary>], iteration_bounds = array<i64: 1, 1>, scalar_prefetch = 0 : i64, scratch_operands = 2 : i64, tpu.core_type = #tpu.core_type<tc>, window_params = [{transform_indices = @transform_0, window_bounds = array<i64: 8, 8, 128>}, {pipeline_mode = #tpu.pipeline_mode<synchronous>, transform_indices = @transform_1, window_bounds = array<i64: 128, 128>}, {pipeline_mode = #tpu.pipeline_mode<synchronous>, transform_indices = @transform_2, window_bounds = array<i64: 1, 128>}, {pipeline_mode = #tpu.pipeline_mode<synchronous>, transform_indices = @transform_3, window_bounds = array<i64: 128, 128>}, {pipeline_mode = #tpu.pipeline_mode<synchronous>, transform_indices = @transform_4, window_bounds = array<i64: 128, 128>}, {pipeline_mode = #tpu.pipeline_mode<synchronous>, transform_indices = @transform_5, window_bounds = array<i64: 1, 128>}, {transform_indices = @transform_6, window_bounds = array<i64: 8, 128>}]} {
    %c0_i32 = arith.constant 0 : i32
    %0 = arith.cmpi eq, %arg1, %c0_i32 : i32
    %1 = arith.extui %0 : i1 to i32
    %c0_i32_0 = arith.constant 0 : i32
    %2 = arith.cmpi ne, %1, %c0_i32_0 : i32
    scf.if %2 {
      %cst_43 = arith.constant 0.000000e+00 : f32
      %66 = vector.broadcast %cst_43 : f32 to vector<8x128xf32>
      %c0_44 = arith.constant 0 : index
      %c0_45 = arith.constant 0 : index
      %67 = vector.load %arg9[%c0_44, %c0_45] : memref<8x128xf32, #tpu.memory_space<vmem>>, vector<8x128xf32>
      tpu.vector_store %arg9[%c0_44, %c0_45], %66 {strides = array<i32>} : memref<8x128xf32, #tpu.memory_space<vmem>>, vector<8x128xf32>,
    } else {
    }
    %c0 = arith.constant 0 : index
    %c0_1 = arith.constant 0 : index
    %c0_2 = arith.constant 0 : index
    %3 = vector.load %arg2[%c0, %c0_1, %c0_2] : memref<8x8x128xf32, #tpu.memory_space<vmem>>, vector<8x8x128xf32>
    %4 = vector.shape_cast %3 : vector<8x8x128xf32> to vector<64x128xf32>
    %c0_3 = arith.constant 0 : index
    %c0_4 = arith.constant 0 : index
    %5 = vector.load %arg3[%c0_3, %c0_4] : memref<128x128xf32, #tpu.memory_space<vmem>>, vector<128x128xf32>
    %cst = arith.constant dense<0.000000e+00> : vector<64x128xf32>
    %6 = tpu.matmul %4, %5, %cst {dimension_numbers = #tpu.dot_dimension_numbers<[1], [0], [0], [1], [0, 0, 1, 1], [], []>} : vector<64x128xf32>, vector<128x128xf32>, vector<64x128xf32> -> vector<64x128xf32>
    %c0_5 = arith.constant 0 : index
    %c0_6 = arith.constant 0 : index
    %7 = vector.load %arg4[%c0_5, %c0_6] : memref<1x128xf32, #tpu.memory_space<vmem>>, vector<1x128xf32>
    %8 = vector.broadcast %7 : vector<1x128xf32> to vector<64x128xf32>
    %9 = arith.addf %6, %8 : vector<64x128xf32>
    %10 = vector.shape_cast %9 : vector<64x128xf32> to vector<8x8x128xf32>
    %c0_7 = arith.constant 0 : index
    %c0_8 = arith.constant 0 : index
    %c0_9 = arith.constant 0 : index
    %11 = vector.load %arg10[%c0_7, %c0_8, %c0_9] : memref<8x8x128xf32, #tpu.memory_space<vmem>>, vector<8x8x128xf32>
    tpu.vector_store %arg10[%c0_7, %c0_8, %c0_9], %10 {strides = array<i32>} : memref<8x8x128xf32, #tpu.memory_space<vmem>>, vector<8x8x128xf32>,
    %c0_10 = arith.constant 0 : index
    %c0_11 = arith.constant 0 : index
    %12 = vector.load %arg5[%c0_10, %c0_11] : memref<128x128xf32, #tpu.memory_space<vmem>>, vector<128x128xf32>
    %c0_12 = arith.constant 0 : index
    %c0_13 = arith.constant 0 : index
    %13 = vector.load %arg9[%c0_12, %c0_13] : memref<8x128xf32, #tpu.memory_space<vmem>>, vector<8x128xf32>
    %c0_i32_14 = arith.constant 0 : i32
    %14 = arith.index_cast %c0_i32_14 : i32 to index
    %c0_15 = arith.constant 0 : index
    %c0_16 = arith.constant 0 : index
    %15 = vector.load %arg10[%14, %c0_15, %c0_16] : memref<8x8x128xf32, #tpu.memory_space<vmem>>, vector<1x8x128xf32>
    %16 = vector.shape_cast %15 : vector<1x8x128xf32> to vector<8x128xf32>
    %cst_17 = arith.constant dense<0.000000e+00> : vector<8x128xf32>
    %17 = tpu.matmul %13, %12, %cst_17 {dimension_numbers = #tpu.dot_dimension_numbers<[1], [0], [0], [1], [0, 0, 1, 1], [], []>} : vector<8x128xf32>, vector<128x128xf32>, vector<8x128xf32> -> vector<8x128xf32>
    %18 = arith.addf %16, %17 : vector<8x128xf32>
    %19 = math.tanh %18 : vector<8x128xf32>
    %c1_i32 = arith.constant 1 : i32
    %20 = arith.index_cast %c1_i32 : i32 to index
    %c0_18 = arith.constant 0 : index
    %c0_19 = arith.constant 0 : index
    %21 = vector.load %arg10[%20, %c0_18, %c0_19] : memref<8x8x128xf32, #tpu.memory_space<vmem>>, vector<1x8x128xf32>
    %22 = vector.shape_cast %21 : vector<1x8x128xf32> to vector<8x128xf32>
    %cst_20 = arith.constant dense<0.000000e+00> : vector<8x128xf32>
    %23 = tpu.matmul %19, %12, %cst_20 {dimension_numbers = #tpu.dot_dimension_numbers<[1], [0], [0], [1], [0, 0, 1, 1], [], []>} : vector<8x128xf32>, vector<128x128xf32>, vector<8x128xf32> -> vector<8x128xf32>
    %24 = arith.addf %22, %23 : vector<8x128xf32>
    %25 = math.tanh %24 : vector<8x128xf32>
    %c2_i32 = arith.constant 2 : i32
    %26 = arith.index_cast %c2_i32 : i32 to index
    %c0_21 = arith.constant 0 : index
    %c0_22 = arith.constant 0 : index
    %27 = vector.load %arg10[%26, %c0_21, %c0_22] : memref<8x8x128xf32, #tpu.memory_space<vmem>>, vector<1x8x128xf32>
    %28 = vector.shape_cast %27 : vector<1x8x128xf32> to vector<8x128xf32>
    %cst_23 = arith.constant dense<0.000000e+00> : vector<8x128xf32>
    %29 = tpu.matmul %25, %12, %cst_23 {dimension_numbers = #tpu.dot_dimension_numbers<[1], [0], [0], [1], [0, 0, 1, 1], [], []>} : vector<8x128xf32>, vector<128x128xf32>, vector<8x128xf32> -> vector<8x128xf32>
    %30 = arith.addf %28, %29 : vector<8x128xf32>
    %31 = math.tanh %30 : vector<8x128xf32>
    %c3_i32 = arith.constant 3 : i32
    %32 = arith.index_cast %c3_i32 : i32 to index
    %c0_24 = arith.constant 0 : index
    %c0_25 = arith.constant 0 : index
    %33 = vector.load %arg10[%32, %c0_24, %c0_25] : memref<8x8x128xf32, #tpu.memory_space<vmem>>, vector<1x8x128xf32>
    %34 = vector.shape_cast %33 : vector<1x8x128xf32> to vector<8x128xf32>
    %cst_26 = arith.constant dense<0.000000e+00> : vector<8x128xf32>
    %35 = tpu.matmul %31, %12, %cst_26 {dimension_numbers = #tpu.dot_dimension_numbers<[1], [0], [0], [1], [0, 0, 1, 1], [], []>} : vector<8x128xf32>, vector<128x128xf32>, vector<8x128xf32> -> vector<8x128xf32>
    %36 = arith.addf %34, %35 : vector<8x128xf32>
    %37 = math.tanh %36 : vector<8x128xf32>
    %c4_i32 = arith.constant 4 : i32
    %38 = arith.index_cast %c4_i32 : i32 to index
    %c0_27 = arith.constant 0 : index
    %c0_28 = arith.constant 0 : index
    %39 = vector.load %arg10[%38, %c0_27, %c0_28] : memref<8x8x128xf32, #tpu.memory_space<vmem>>, vector<1x8x128xf32>
    %40 = vector.shape_cast %39 : vector<1x8x128xf32> to vector<8x128xf32>
    %cst_29 = arith.constant dense<0.000000e+00> : vector<8x128xf32>
    %41 = tpu.matmul %37, %12, %cst_29 {dimension_numbers = #tpu.dot_dimension_numbers<[1], [0], [0], [1], [0, 0, 1, 1], [], []>} : vector<8x128xf32>, vector<128x128xf32>, vector<8x128xf32> -> vector<8x128xf32>
    %42 = arith.addf %40, %41 : vector<8x128xf32>
    %43 = math.tanh %42 : vector<8x128xf32>
    %c5_i32 = arith.constant 5 : i32
    %44 = arith.index_cast %c5_i32 : i32 to index
    %c0_30 = arith.constant 0 : index
    %c0_31 = arith.constant 0 : index
    %45 = vector.load %arg10[%44, %c0_30, %c0_31] : memref<8x8x128xf32, #tpu.memory_space<vmem>>, vector<1x8x128xf32>
    %46 = vector.shape_cast %45 : vector<1x8x128xf32> to vector<8x128xf32>
    %cst_32 = arith.constant dense<0.000000e+00> : vector<8x128xf32>
    %47 = tpu.matmul %43, %12, %cst_32 {dimension_numbers = #tpu.dot_dimension_numbers<[1], [0], [0], [1], [0, 0, 1, 1], [], []>} : vector<8x128xf32>, vector<128x128xf32>, vector<8x128xf32> -> vector<8x128xf32>
    %48 = arith.addf %46, %47 : vector<8x128xf32>
    %49 = math.tanh %48 : vector<8x128xf32>
    %c6_i32 = arith.constant 6 : i32
    %50 = arith.index_cast %c6_i32 : i32 to index
    %c0_33 = arith.constant 0 : index
    %c0_34 = arith.constant 0 : index
    %51 = vector.load %arg10[%50, %c0_33, %c0_34] : memref<8x8x128xf32, #tpu.memory_space<vmem>>, vector<1x8x128xf32>
    %52 = vector.shape_cast %51 : vector<1x8x128xf32> to vector<8x128xf32>
    %cst_35 = arith.constant dense<0.000000e+00> : vector<8x128xf32>
    %53 = tpu.matmul %49, %12, %cst_35 {dimension_numbers = #tpu.dot_dimension_numbers<[1], [0], [0], [1], [0, 0, 1, 1], [], []>} : vector<8x128xf32>, vector<128x128xf32>, vector<8x128xf32> -> vector<8x128xf32>
    %54 = arith.addf %52, %53 : vector<8x128xf32>
    %55 = math.tanh %54 : vector<8x128xf32>
    %c7_i32 = arith.constant 7 : i32
    %56 = arith.index_cast %c7_i32 : i32 to index
    %c0_36 = arith.constant 0 : index
    %c0_37 = arith.constant 0 : index
    %57 = vector.load %arg10[%56, %c0_36, %c0_37] : memref<8x8x128xf32, #tpu.memory_space<vmem>>, vector<1x8x128xf32>
    %58 = vector.shape_cast %57 : vector<1x8x128xf32> to vector<8x128xf32>
    %cst_38 = arith.constant dense<0.000000e+00> : vector<8x128xf32>
    %59 = tpu.matmul %55, %12, %cst_38 {dimension_numbers = #tpu.dot_dimension_numbers<[1], [0], [0], [1], [0, 0, 1, 1], [], []>} : vector<8x128xf32>, vector<128x128xf32>, vector<8x128xf32> -> vector<8x128xf32>
    %60 = arith.addf %58, %59 : vector<8x128xf32>
    %61 = math.tanh %60 : vector<8x128xf32>
    %c8_i32 = arith.constant 8 : i32
    %c0_39 = arith.constant 0 : index
    %c0_40 = arith.constant 0 : index
    %62 = vector.load %arg9[%c0_39, %c0_40] : memref<8x128xf32, #tpu.memory_space<vmem>>, vector<8x128xf32>
    tpu.vector_store %arg9[%c0_39, %c0_40], %61 {strides = array<i32>} : memref<8x128xf32, #tpu.memory_space<vmem>>, vector<8x128xf32>,
    %c0_i32_41 = arith.constant 0 : i32
    %63 = arith.cmpi eq, %arg1, %c0_i32_41 : i32
    %64 = arith.extui %63 : i1 to i32
    %c0_i32_42 = arith.constant 0 : i32
    %65 = arith.cmpi ne, %64, %c0_i32_42 : i32
    scf.if %65 {
      %c0_43 = arith.constant 0 : index
      %c0_44 = arith.constant 0 : index
      %66 = vector.load %arg9[%c0_43, %c0_44] : memref<8x128xf32, #tpu.memory_space<vmem>>, vector<8x128xf32>
      %c0_45 = arith.constant 0 : index
      %c0_46 = arith.constant 0 : index
      %67 = vector.load %arg6[%c0_45, %c0_46] : memref<128x128xf32, #tpu.memory_space<vmem>>, vector<128x128xf32>
      %cst_47 = arith.constant dense<0.000000e+00> : vector<8x128xf32>
      %68 = tpu.matmul %66, %67, %cst_47 {dimension_numbers = #tpu.dot_dimension_numbers<[1], [0], [0], [1], [0, 0, 1, 1], [], []>} : vector<8x128xf32>, vector<128x128xf32>, vector<8x128xf32> -> vector<8x128xf32>
      %c0_48 = arith.constant 0 : index
      %c0_49 = arith.constant 0 : index
      %69 = vector.load %arg7[%c0_48, %c0_49] : memref<1x128xf32, #tpu.memory_space<vmem>>, vector<1x128xf32>
      %70 = vector.broadcast %69 : vector<1x128xf32> to vector<8x128xf32>
      %71 = arith.addf %68, %70 : vector<8x128xf32>
      %c0_50 = arith.constant 0 : index
      %c0_51 = arith.constant 0 : index
      %72 = vector.load %arg8[%c0_50, %c0_51] : memref<8x128xf32, #tpu.memory_space<vmem>>, vector<8x128xf32>
      tpu.vector_store %arg8[%c0_50, %c0_51], %71 {strides = array<i32>} : memref<8x128xf32, #tpu.memory_space<vmem>>, vector<8x128xf32>,
    } else {
    }
    return
  }
  func.func @transform_0(%arg0: i32, %arg1: i32) -> (i32, i32, i32) {
    %c0_i32 = arith.constant 0 : i32
    %c0_i32_0 = arith.constant 0 : i32
    return %arg1, %arg0, %c0_i32 : i32, i32, i32
  }
  func.func @transform_1(%arg0: i32, %arg1: i32) -> (i32, i32) {
    %c0_i32 = arith.constant 0 : i32
    %c0_i32_0 = arith.constant 0 : i32
    %c0_i32_1 = arith.constant 0 : i32
    return %c0_i32, %c0_i32_0 : i32, i32
  }
  func.func @transform_2(%arg0: i32, %arg1: i32) -> (i32, i32) {
    %c0_i32 = arith.constant 0 : i32
    %c0_i32_0 = arith.constant 0 : i32
    %c0_i32_1 = arith.constant 0 : i32
    return %c0_i32, %c0_i32_0 : i32, i32
  }
  func.func @transform_3(%arg0: i32, %arg1: i32) -> (i32, i32) {
    %c0_i32 = arith.constant 0 : i32
    %c0_i32_0 = arith.constant 0 : i32
    %c0_i32_1 = arith.constant 0 : i32
    return %c0_i32, %c0_i32_0 : i32, i32
  }
  func.func @transform_4(%arg0: i32, %arg1: i32) -> (i32, i32) {
    %c0_i32 = arith.constant 0 : i32
    %c0_i32_0 = arith.constant 0 : i32
    %c0_i32_1 = arith.constant 0 : i32
    return %c0_i32, %c0_i32_0 : i32, i32
  }
  func.func @transform_5(%arg0: i32, %arg1: i32) -> (i32, i32) {
    %c0_i32 = arith.constant 0 : i32
    %c0_i32_0 = arith.constant 0 : i32
    %c0_i32_1 = arith.constant 0 : i32
    return %c0_i32, %c0_i32_0 : i32, i32
  }
  func.func @transform_6(%arg0: i32, %arg1: i32) -> (i32, i32) {
    %c0_i32 = arith.constant 0 : i32
    %c0_i32_0 = arith.constant 0 : i32
    return %arg0, %c0_i32 : i32, i32
  }
}

</mosaic_0001>

<llo_original>
// kernel: tpu_custom_call.1
$region0: #{tpu_custom_call.1}
  #allocation0 [shape = 'u32[]', space=smem, size = 0x4, offset = 0x4, fixed_abs, tag = 'smem constant byte address 0x4 - core index']
  #allocation1 [shape = 'u32[144,128]{1,0:T(1,128)}', space=vmem, size = 0x12000, scoped, tag = 'internal scratch']
  #allocation2 [shape = 'f32[8,128]{1,0:T(8,128)}', space=vmem, size = 0x1000, scoped, tag = 'scratch operand']
  #allocation3 [shape = 'f32[8,8,128]{2,1,0:T(8,128)}', space=vmem, size = 0x8000, scoped, tag = 'scratch operand']
  %s0 = inlined_call_operand.hbm [shape: f32[8,8,128], index: 0, kind: input, shape index: {}]
  %s1 = inlined_call_operand.hbm [shape: f32[128,128], index: 1, kind: input, shape index: {}]
  %s2 = inlined_call_operand.vmem [shape: f32[1,128], index: 2, kind: input, shape index: {}]
  %s3 = inlined_call_operand.hbm [shape: f32[128,128], index: 3, kind: input, shape index: {}]
  %s4 = inlined_call_operand.hbm [shape: f32[128,128], index: 4, kind: input, shape index: {}]
  %s5 = inlined_call_operand.vmem [shape: f32[1,128], index: 5, kind: input, shape index: {}]
  %s6 = inlined_call_operand.hbm [shape: f32[8,128], index: 6, kind: output, shape index: {}]
  %s7 = sld [smem:[#allocation0]]
  $region58: #{tpu_custom_call.1} parent=0
    _
  %s9 = ssub.s32 1, %s7
  %s10 = scalar_select 0, %s9, %s7
  $region1: #{tpu_custom_call.1} parent=0
    #allocation4 [shape = 'u8[32768]{0}', space=vmem, size = 0x8000, scoped, tag = 'input window, operand 0, single buffered']
    #allocation5 [shape = 's32[1]{0}', space=sflag, size = 0x4, scoped, tag = 'scoped memory for tpu_custom_call.1']
    #allocation6 [shape = 's32[1]{0}', space=sflag, size = 0x4, scoped, tag = 'scoped memory for tpu_custom_call.1']
    #allocation7 [shape = 'u8[65536]{0}', space=vmem, size = 0x10000, scoped, tag = 'input window, operand 1, single buffered']
    #allocation8 [shape = 's32[1]{0}', space=sflag, size = 0x4, scoped, tag = 'scoped memory for tpu_custom_call.1']
    #allocation9 [shape = 'u8[65536]{0}', space=vmem, size = 0x10000, scoped, tag = 'input window, operand 3, single buffered']
    #allocation10 [shape = 'u8[65536]{0}', space=vmem, size = 0x10000, scoped, tag = 'input window, operand 4, single buffered']
    #allocation11 [shape = 's32[1]{0}', space=sflag, size = 0x4, scoped, tag = 'scoped memory for tpu_custom_call.1']
    #allocation12 [shape = 'u8[4096]{0}', space=vmem, size = 0x1000, scoped, tag = 'output window, operand 0, single buffered']
    %11 = vsyncpa [#allocation5], 0
    %12 = vsyncpa [#allocation8], 0
    %13 = vsyncpa [#allocation11], 0
    %14 = vsyncpa [#allocation6], 0
    // Predicated region
    $region2: #{tpu_custom_call.1} parent=1 // pred_check
      _
    $region3: #{tpu_custom_call.1} parent=1 // pred_check_branch
      %16 = sbr.rel (0) target = $region5
    $region4: #{tpu_custom_call.1} parent=1 // pred_region
      %s18 = ssub.s32 1024, 1024
      %19 = vsyncadd [#allocation5], %s18
      %s20 = sshll.u32 [#allocation4], 4
      %s21 = int_to_ptr.vmem [resolvable:$true] %s20
      %26 = dma.hbm_to_vmem [thread:$0]  %s0, 1024, %s21, [#allocation5], 128, 128, 8
    $region5: #{tpu_custom_call.1} parent=1 // pred_fallthru
      _
    // Predicated region
    $region6: #{tpu_custom_call.1} parent=1 // pred_check
      _
    $region7: #{tpu_custom_call.1} parent=1 // pred_check_branch
      %28 = sbr.rel (0) target = $region9
    $region8: #{tpu_custom_call.1} parent=1 // pred_region
      %s30 = ssub.s32 2048, 2048
      %31 = vsyncadd [#allocation8], %s30
      %s32 = sshll.u32 [#allocation7], 4
      %s33 = int_to_ptr.vmem [resolvable:$true] %s32
      %38 = dma.hbm_to_vmem [thread:$0]  %s1, 2048, %s33, [#allocation8], 128, 128, 8
    $region9: #{tpu_custom_call.1} parent=1 // pred_fallthru
      _
    // Predicated region
    $region10: #{tpu_custom_call.1} parent=1 // pred_check
      _
    $region11: #{tpu_custom_call.1} parent=1 // pred_check_branch
      %40 = sbr.rel (0) target = $region13
    $region12: #{tpu_custom_call.1} parent=1 // pred_region
      _
    $region13: #{tpu_custom_call.1} parent=1 // pred_fallthru
      _
    // Predicated region
    $region14: #{tpu_custom_call.1} parent=1 // pred_check
      _
    $region15: #{tpu_custom_call.1} parent=1 // pred_check_branch
      %42 = sbr.rel (0) target = $region17
    $region16: #{tpu_custom_call.1} parent=1 // pred_region
      %s44 = ssub.s32 2048, 2048
      %45 = vsyncadd [#allocation8], %s44
      %s46 = sshll.u32 [#allocation9], 4
      %s47 = int_to_ptr.vmem [resolvable:$true] %s46
      %52 = dma.hbm_to_vmem [thread:$0]  %s3, 2048, %s47, [#allocation8], 128, 128, 8
    $region17: #{tpu_custom_call.1} parent=1 // pred_fallthru
      _
    // Predicated region
    $region18: #{tpu_custom_call.1} parent=1 // pred_check
      _
    $region19: #{tpu_custom_call.1} parent=1 // pred_check_branch
      %54 = sbr.rel (0) target = $region21
    $region20: #{tpu_custom_call.1} parent=1 // pred_region
      %s56 = ssub.s32 2048, 2048
      %57 = vsyncadd [#allocation11], %s56
      %s58 = sshll.u32 [#allocation10], 4
      %s59 = int_to_ptr.vmem [resolvable:$true] %s58
      %64 = dma.hbm_to_vmem [thread:$0]  %s4, 2048, %s59, [#allocation11], 128, 128, 8
    $region21: #{tpu_custom_call.1} parent=1 // pred_fallthru
      _
    // Predicated region
    $region22: #{tpu_custom_call.1} parent=1 // pred_check
      _
    $region23: #{tpu_custom_call.1} parent=1 // pred_check_branch
      %66 = sbr.rel (0) target = $region25
    $region24: #{tpu_custom_call.1} parent=1 // pred_region
      _
    $region25: #{tpu_custom_call.1} parent=1 // pred_fallthru
      _
    // Predicated region
    $region26: #{tpu_custom_call.1} parent=1 // pred_check
      _
    $region27: #{tpu_custom_call.1} parent=1 // pred_check_branch
      %68 = sbr.rel (0) target = $region29
    $region28: #{tpu_custom_call.1} parent=1 // pred_region
      %69 = dma.done [#allocation5], 1024
    $region29: #{tpu_custom_call.1} parent=1 // pred_fallthru
      _
    // Predicated region
    $region30: #{tpu_custom_call.1} parent=1 // pred_check
      _
    $region31: #{tpu_custom_call.1} parent=1 // pred_check_branch
      %71 = sbr.rel (0) target = $region33
    $region32: #{tpu_custom_call.1} parent=1 // pred_region
      %72 = dma.done [#allocation8], 2048
    $region33: #{tpu_custom_call.1} parent=1 // pred_fallthru
      _
    // Predicated region
    $region34: #{tpu_custom_call.1} parent=1 // pred_check
      _
    $region35: #{tpu_custom_call.1} parent=1 // pred_check_branch
      %74 = sbr.rel (0) target = $region37
    $region36: #{tpu_custom_call.1} parent=1 // pred_region
      %75 = dma.done [#allocation8], 2048
    $region37: #{tpu_custom_call.1} parent=1 // pred_fallthru
      _
    // Predicated region
    $region38: #{tpu_custom_call.1} parent=1 // pred_check
      _
    $region39: #{tpu_custom_call.1} parent=1 // pred_check_branch
      %77 = sbr.rel (0) target = $region41
    $region40: #{tpu_custom_call.1} parent=1 // pred_region
      %78 = dma.done [#allocation11], 2048
    $region41: #{tpu_custom_call.1} parent=1 // pred_fallthru
      _
    %p79 = scmp.eq.s32.totalorder 0, 0
    // Predicated region
    $region42: #{tpu_custom_call.1} parent=1 // pred_check
      %p80 = pneg %p79
    $region43: #{tpu_custom_call.1} parent=1 // pred_check_branch
      %82 = sbr.rel (%p80) target = $region45
    $region44: #{tpu_custom_call.1} parent=1 // pred_region
      %83 = vst [vmem:[#allocation2] sm:$0xff] 0.0
    $region45: #{tpu_custom_call.1} parent=1 // pred_fallthru
      _
    %v84 = vld [vmem:[#allocation4] sm:$0xff]
    %v85 = vld [vmem:[#allocation4 + $0x8] sm:$0xff]
    %v86 = vld [vmem:[#allocation4 + $0x10] sm:$0xff]
    %v87 = vld [vmem:[#allocation4 + $0x18] sm:$0xff]
    %v88 = vld [vmem:[#allocation4 + $0x20] sm:$0xff]
    %v89 = vld [vmem:[#allocation4 + $0x28] sm:$0xff]
    %v90 = vld [vmem:[#allocation4 + $0x30] sm:$0xff]
    %v91 = vld [vmem:[#allocation4 + $0x38] sm:$0xff]
    %v92 = vld [vmem:[#allocation7] sm:$0xff]
    %v93 = vld [vmem:[#allocation7 + $0x8] sm:$0xff]
    %v94 = vld [vmem:[#allocation7 + $0x10] sm:$0xff]
    %v95 = vld [vmem:[#allocation7 + $0x18] sm:$0xff]
    %v96 = vld [vmem:[#allocation7 + $0x20] sm:$0xff]
    %v97 = vld [vmem:[#allocation7 + $0x28] sm:$0xff]
    %v98 = vld [vmem:[#allocation7 + $0x30] sm:$0xff]
    %v99 = vld [vmem:[#allocation7 + $0x38] sm:$0xff]
    %v100 = vld [vmem:[#allocation7 + $0x40] sm:$0xff]
    %v101 = vld [vmem:[#allocation7 + $0x48] sm:$0xff]
    %v102 = vld [vmem:[#allocation7 + $0x50] sm:$0xff]
    %v103 = vld [vmem:[#allocation7 + $0x58] sm:$0xff]
    %v104 = vld [vmem:[#allocation7 + $0x60] sm:$0xff]
    %v105 = vld [vmem:[#allocation7 + $0x68] sm:$0xff]
    %v106 = vld [vmem:[#allocation7 + $0x70] sm:$0xff]
    %v107 = vld [vmem:[#allocation7 + $0x78] sm:$0xff]
    %v108 = vld [vmem:[%s2] sm:$0x1]
    %v110 = vlaneseq
    %v111 = vshrl.u32 %v110, 7
    %v112 = vsub.s32 0, %v111
    %v113 = vrot.slane %v108, %v112
    %115 = vmatprep.subr.mxu0 0.0
    %116 = vmatpush1.msra.mxu0 %v107
    %117 = vmatprep.subr.mxu0 0.0
    %118 = vmatpush1.msra.mxu0 %v106
    %119 = vmatprep.subr.mxu0 0.0
    %120 = vmatpush1.msra.mxu0 %v105
    %121 = vmatprep.subr.mxu0 0.0
    %122 = vmatpush1.msra.mxu0 %v104
    %123 = vmatprep.subr.mxu0 0.0
    %124 = vmatpush1.msra.mxu0 %v103
    %125 = vmatprep.subr.mxu0 0.0
    %126 = vmatpush1.msra.mxu0 %v102
    %127 = vmatprep.subr.mxu0 0.0
    %128 = vmatpush1.msra.mxu0 %v101
    %129 = vmatprep.subr.mxu0 0.0
    %130 = vmatpush1.msra.mxu0 %v100
    %131 = vmatprep.subr.mxu0 0.0
    %132 = vmatpush1.msra.mxu0 %v99
    %133 = vmatprep.subr.mxu0 0.0
    %134 = vmatpush1.msra.mxu0 %v98
    %135 = vmatprep.subr.mxu0 0.0
    %136 = vmatpush1.msra.mxu0 %v97
    %137 = vmatprep.subr.mxu0 0.0
    %138 = vmatpush1.msra.mxu0 %v96
    %139 = vmatprep.subr.mxu0 0.0
    %140 = vmatpush1.msra.mxu0 %v95
    %141 = vmatprep.subr.mxu0 0.0
    %142 = vmatpush1.msra.mxu0 %v94
    %143 = vmatprep.subr.mxu0 0.0
    %144 = vmatpush1.msra.mxu0 %v93
    %145 = vmatprep.subr.mxu0 0.0
    %146 = vmatpush1.msra.mxu0 %v92
    %147 = vmatprep.subr.mxu0 0.0
    %148 = vmatpush2.msra.mxu0 0.0
    %149 = vmatprep.subr.mxu0 0.0
    %150 = vmatpush2.msra.mxu0 0.0
    %151 = vmatprep.subr.mxu0 0.0
    %152 = vmatpush2.msra.mxu0 0.0
    %153 = vmatprep.subr.mxu0 0.0
    %154 = vmatpush2.msra.mxu0 0.0
    %155 = vmatprep.subr.mxu0 0.0
    %156 = vmatpush2.msra.mxu0 0.0
    %157 = vmatprep.subr.mxu0 0.0
    %158 = vmatpush2.msra.mxu0 0.0
    %159 = vmatprep.subr.mxu0 0.0
    %160 = vmatpush2.msra.mxu0 0.0
    %161 = vmatprep.subr.mxu0 0.0
    %162 = vmatpush2.msra.mxu0 0.0
    %163 = vmatprep.subr.mxu0 0.0
    %164 = vmatpush2.msra.mxu0 0.0
    %165 = vmatprep.subr.mxu0 0.0
    %166 = vmatpush2.msra.mxu0 0.0
    %167 = vmatprep.subr.mxu0 0.0
    %168 = vmatpush2.msra.mxu0 0.0
    %169 = vmatprep.subr.mxu0 0.0
    %170 = vmatpush2.msra.mxu0 0.0
    %171 = vmatprep.subr.mxu0 0.0
    %172 = vmatpush2.msra.mxu0 0.0
    %173 = vmatprep.subr.mxu0 0.0
    %174 = vmatpush2.msra.mxu0 0.0
    %175 = vmatprep.subr.mxu0 0.0
    %176 = vmatpush2.msra.mxu0 0.0
    %177 = vmatprep.subr.mxu0 0.0
    %178 = vmatpush2.msra.mxu0 0.0
    %179 = vmatprep.mubr.f32.mxu0 0.0
    %180 = vmatmul.mubr.f32.gmra.mxu0 %v84
    %v181 = vpop.f32.mrf.mxu0
    %v182 = vadd.f32 %v113, %v181
    %v183 = vpop.f32.mrf.mxu0
    %184 = vmatprep.mubr.f32.mxu0 0.0
    %185 = vmatmul.mubr.f32.gmra.mxu0 %v85
    %v186 = vpop.f32.mrf.mxu0
    %v187 = vadd.f32 %v113, %v186
    %v188 = vpop.f32.mrf.mxu0
    %189 = vmatprep.mubr.f32.mxu0 0.0
    %190 = vmatmul.mubr.f32.gmra.mxu0 %v86
    %v191 = vpop.f32.mrf.mxu0
    %v192 = vadd.f32 %v113, %v191
    %v193 = vpop.f32.mrf.mxu0
    %194 = vmatprep.mubr.f32.mxu0 0.0
    %195 = vmatmul.mubr.f32.gmra.mxu0 %v87
    %v196 = vpop.f32.mrf.mxu0
    %v197 = vadd.f32 %v113, %v196
    %v198 = vpop.f32.mrf.mxu0
    %199 = vmatprep.mubr.f32.mxu0 0.0
    %200 = vmatmul.mubr.f32.gmra.mxu0 %v88
    %v201 = vpop.f32.mrf.mxu0
    %v202 = vadd.f32 %v113, %v201
    %v203 = vpop.f32.mrf.mxu0
    %204 = vmatprep.mubr.f32.mxu0 0.0
    %205 = vmatmul.mubr.f32.gmra.mxu0 %v89
    %v206 = vpop.f32.mrf.mxu0
    %v207 = vadd.f32 %v113, %v206
    %v208 = vpop.f32.mrf.mxu0
    %209 = vmatprep.mubr.f32.mxu0 0.0
    %210 = vmatmul.mubr.f32.gmra.mxu0 %v90
    %v211 = vpop.f32.mrf.mxu0
    %v212 = vadd.f32 %v113, %v211
    %v213 = vpop.f32.mrf.mxu0
    %214 = vmatprep.mubr.f32.mxu0 0.0
    %215 = vmatmul.mubr.f32.gmra.mxu0 %v91
    %v216 = vpop.f32.mrf.mxu0
    %v217 = vadd.f32 %v113, %v216
    %v218 = vpop.f32.mrf.mxu0
    %219 = vdwg.mxu0
    %220 = vst [vmem:[#allocation3] sm:$0xff] %v182
    %221 = vst [vmem:[#allocation3 + $0x8] sm:$0xff] %v187
    %222 = vst [vmem:[#allocation3 + $0x10] sm:$0xff] %v192
    %223 = vst [vmem:[#allocation3 + $0x18] sm:$0xff] %v197
    %224 = vst [vmem:[#allocation3 + $0x20] sm:$0xff] %v202
    %225 = vst [vmem:[#allocation3 + $0x28] sm:$0xff] %v207
    %226 = vst [vmem:[#allocation3 + $0x30] sm:$0xff] %v212
    %227 = vst [vmem:[#allocation3 + $0x38] sm:$0xff] %v217
    %v228 = vld [vmem:[#allocation9] sm:$0xff]
    %v229 = vld [vmem:[#allocation9 + $0x8] sm:$0xff]
    %v230 = vld [vmem:[#allocation9 + $0x10] sm:$0xff]
    %v231 = vld [vmem:[#allocation9 + $0x18] sm:$0xff]
    %v232 = vld [vmem:[#allocation9 + $0x20] sm:$0xff]
    %v233 = vld [vmem:[#allocation9 + $0x28] sm:$0xff]
    %v234 = vld [vmem:[#allocation9 + $0x30] sm:$0xff]
    %v235 = vld [vmem:[#allocation9 + $0x38] sm:$0xff]
    %v236 = vld [vmem:[#allocation9 + $0x40] sm:$0xff]
    %v237 = vld [vmem:[#allocation9 + $0x48] sm:$0xff]
    %v238 = vld [vmem:[#allocation9 + $0x50] sm:$0xff]
    %v239 = vld [vmem:[#allocation9 + $0x58] sm:$0xff]
    %v240 = vld [vmem:[#allocation9 + $0x60] sm:$0xff]
    %v241 = vld [vmem:[#allocation9 + $0x68] sm:$0xff]
    %v242 = vld [vmem:[#allocation9 + $0x70] sm:$0xff]
    %v243 = vld [vmem:[#allocation9 + $0x78] sm:$0xff]
    %v244 = vld [vmem:[#allocation2] sm:$0xff]
    %v245 = vld [vmem:[#allocation3] sm:$0xff]
    %246 = vmatprep.subr.mxu0 0.0
    %247 = vmatpush1.msra.mxu0 %v243
    %248 = vmatprep.subr.mxu0 0.0
    %249 = vmatpush1.msra.mxu0 %v242
    %250 = vmatprep.subr.mxu0 0.0
    %251 = vmatpush1.msra.mxu0 %v241
    %252 = vmatprep.subr.mxu0 0.0
    %253 = vmatpush1.msra.mxu0 %v240
    %254 = vmatprep.subr.mxu0 0.0
    %255 = vmatpush1.msra.mxu0 %v239
    %256 = vmatprep.subr.mxu0 0.0
    %257 = vmatpush1.msra.mxu0 %v238
    %258 = vmatprep.subr.mxu0 0.0
    %259 = vmatpush1.msra.mxu0 %v237
    %260 = vmatprep.subr.mxu0 0.0
    %261 = vmatpush1.msra.mxu0 %v236
    %262 = vmatprep.subr.mxu0 0.0
    %263 = vmatpush1.msra.mxu0 %v235
    %264 = vmatprep.subr.mxu0 0.0
    %265 = vmatpush1.msra.mxu0 %v234
    %266 = vmatprep.subr.mxu0 0.0
    %267 = vmatpush1.msra.mxu0 %v233
    %268 = vmatprep.subr.mxu0 0.0
    %269 = vmatpush1.msra.mxu0 %v232
    %270 = vmatprep.subr.mxu0 0.0
    %271 = vmatpush1.msra.mxu0 %v231
    %272 = vmatprep.subr.mxu0 0.0
    %273 = vmatpush1.msra.mxu0 %v230
    %274 = vmatprep.subr.mxu0 0.0
    %275 = vmatpush1.msra.mxu0 %v229
    %276 = vmatprep.subr.mxu0 0.0
    %277 = vmatpush1.msra.mxu0 %v228
    %278 = vmatprep.subr.mxu0 0.0
    %279 = vmatpush2.msra.mxu0 0.0
    %280 = vmatprep.subr.mxu0 0.0
    %281 = vmatpush2.msra.mxu0 0.0
    %282 = vmatprep.subr.mxu0 0.0
    %283 = vmatpush2.msra.mxu0 0.0
    %284 = vmatprep.subr.mxu0 0.0
    %285 = vmatpush2.msra.mxu0 0.0
    %286 = vmatprep.subr.mxu0 0.0
    %287 = vmatpush2.msra.mxu0 0.0
    %288 = vmatprep.subr.mxu0 0.0
    %289 = vmatpush2.msra.mxu0 0.0
    %290 = vmatprep.subr.mxu0 0.0
    %291 = vmatpush2.msra.mxu0 0.0
    %292 = vmatprep.subr.mxu0 0.0
    %293 = vmatpush2.msra.mxu0 0.0
    %294 = vmatprep.subr.mxu0 0.0
    %295 = vmatpush2.msra.mxu0 0.0
    %296 = vmatprep.subr.mxu0 0.0
    %297 = vmatpush2.msra.mxu0 0.0
    %298 = vmatprep.subr.mxu0 0.0
    %299 = vmatpush2.msra.mxu0 0.0
    %300 = vmatprep.subr.mxu0 0.0
    %301 = vmatpush2.msra.mxu0 0.0
    %302 = vmatprep.subr.mxu0 0.0
    %303 = vmatpush2.msra.mxu0 0.0
    %304 = vmatprep.subr.mxu0 0.0
    %305 = vmatpush2.msra.mxu0 0.0
    %306 = vmatprep.subr.mxu0 0.0
    %307 = vmatpush2.msra.mxu0 0.0
    %308 = vmatprep.subr.mxu0 0.0
    %309 = vmatpush2.msra.mxu0 0.0
    %310 = vmatprep.mubr.f32.mxu0 0.0
    %311 = vmatmul.mubr.f32.gmra.mxu0 %v244
    %v312 = vpop.f32.mrf.mxu0
    %v313 = vadd.f32 0.0, %v312
    %v314 = vpop.f32.mrf.mxu0
    %315 = vdwg.mxu0
    %v316 = vadd.f32 %v245, %v313
    %v317 = vtanh.pop %v316
    %s318 = scalar_lea.vmem [#allocation3], 8
    %v319 = vld [vmem:[%s318] sm:$0xff]
    %320 = vmatprep.subr.mxu0 0.0
    %321 = vmatpush1.msra.mxu0 %v243
    %322 = vmatprep.subr.mxu0 0.0
    %323 = vmatpush1.msra.mxu0 %v242
    %324 = vmatprep.subr.mxu0 0.0
    %325 = vmatpush1.msra.mxu0 %v241
    %326 = vmatprep.subr.mxu0 0.0
    %327 = vmatpush1.msra.mxu0 %v240
    %328 = vmatprep.subr.mxu0 0.0
    %329 = vmatpush1.msra.mxu0 %v239
    %330 = vmatprep.subr.mxu0 0.0
    %331 = vmatpush1.msra.mxu0 %v238
    %332 = vmatprep.subr.mxu0 0.0
    %333 = vmatpush1.msra.mxu0 %v237
    %334 = vmatprep.subr.mxu0 0.0
    %335 = vmatpush1.msra.mxu0 %v236
    %336 = vmatprep.subr.mxu0 0.0
    %337 = vmatpush1.msra.mxu0 %v235
    %338 = vmatprep.subr.mxu0 0.0
    %339 = vmatpush1.msra.mxu0 %v234
    %340 = vmatprep.subr.mxu0 0.0
    %341 = vmatpush1.msra.mxu0 %v233
    %342 = vmatprep.subr.mxu0 0.0
    %343 = vmatpush1.msra.mxu0 %v232
    %344 = vmatprep.subr.mxu0 0.0
    %345 = vmatpush1.msra.mxu0 %v231
    %346 = vmatprep.subr.mxu0 0.0
    %347 = vmatpush1.msra.mxu0 %v230
    %348 = vmatprep.subr.mxu0 0.0
    %349 = vmatpush1.msra.mxu0 %v229
    %350 = vmatprep.subr.mxu0 0.0
    %351 = vmatpush1.msra.mxu0 %v228
    %352 = vmatprep.subr.mxu0 0.0
    %353 = vmatpush2.msra.mxu0 0.0
    %354 = vmatprep.subr.mxu0 0.0
    %355 = vmatpush2.msra.mxu0 0.0
    %356 = vmatprep.subr.mxu0 0.0
    %357 = vmatpush2.msra.mxu0 0.0
    %358 = vmatprep.subr.mxu0 0.0
    %359 = vmatpush2.msra.mxu0 0.0
    %360 = vmatprep.subr.mxu0 0.0
    %361 = vmatpush2.msra.mxu0 0.0
    %362 = vmatprep.subr.mxu0 0.0
    %363 = vmatpush2.msra.mxu0 0.0
    %364 = vmatprep.subr.mxu0 0.0
    %365 = vmatpush2.msra.mxu0 0.0
    %366 = vmatprep.subr.mxu0 0.0
    %367 = vmatpush2.msra.mxu0 0.0
    %368 = vmatprep.subr.mxu0 0.0
    %369 = vmatpush2.msra.mxu0 0.0
    %370 = vmatprep.subr.mxu0 0.0
    %371 = vmatpush2.msra.mxu0 0.0
    %372 = vmatprep.subr.mxu0 0.0
    %373 = vmatpush2.msra.mxu0 0.0
    %374 = vmatprep.subr.mxu0 0.0
    %375 = vmatpush2.msra.mxu0 0.0
    %376 = vmatprep.subr.mxu0 0.0
    %377 = vmatpush2.msra.mxu0 0.0
    %378 = vmatprep.subr.mxu0 0.0
    %379 = vmatpush2.msra.mxu0 0.0
    %380 = vmatprep.subr.mxu0 0.0
    %381 = vmatpush2.msra.mxu0 0.0
    %382 = vmatprep.subr.mxu0 0.0
    %383 = vmatpush2.msra.mxu0 0.0
    %384 = vmatprep.mubr.f32.mxu0 0.0
    %385 = vmatmul.mubr.f32.gmra.mxu0 %v317
    %v386 = vpop.f32.mrf.mxu0
    %v387 = vadd.f32 0.0, %v386
    %v388 = vpop.f32.mrf.mxu0
    %389 = vdwg.mxu0
    %v390 = vadd.f32 %v319, %v387
    %v391 = vtanh.pop %v390
    %s392 = scalar_lea.vmem [#allocation3], 16
    %v393 = vld [vmem:[%s392] sm:$0xff]
    %394 = vmatprep.subr.mxu0 0.0
    %395 = vmatpush1.msra.mxu0 %v243
    %396 = vmatprep.subr.mxu0 0.0
    %397 = vmatpush1.msra.mxu0 %v242
    %398 = vmatprep.subr.mxu0 0.0
    %399 = vmatpush1.msra.mxu0 %v241
    %400 = vmatprep.subr.mxu0 0.0
    %401 = vmatpush1.msra.mxu0 %v240
    %402 = vmatprep.subr.mxu0 0.0
    %403 = vmatpush1.msra.mxu0 %v239
    %404 = vmatprep.subr.mxu0 0.0
    %405 = vmatpush1.msra.mxu0 %v238
    %406 = vmatprep.subr.mxu0 0.0
    %407 = vmatpush1.msra.mxu0 %v237
    %408 = vmatprep.subr.mxu0 0.0
    %409 = vmatpush1.msra.mxu0 %v236
    %410 = vmatprep.subr.mxu0 0.0
    %411 = vmatpush1.msra.mxu0 %v235
    %412 = vmatprep.subr.mxu0 0.0
    %413 = vmatpush1.msra.mxu0 %v234
    %414 = vmatprep.subr.mxu0 0.0
    %415 = vmatpush1.msra.mxu0 %v233
    %416 = vmatprep.subr.mxu0 0.0
    %417 = vmatpush1.msra.mxu0 %v232
    %418 = vmatprep.subr.mxu0 0.0
    %419 = vmatpush1.msra.mxu0 %v231
    %420 = vmatprep.subr.mxu0 0.0
    %421 = vmatpush1.msra.mxu0 %v230
    %422 = vmatprep.subr.mxu0 0.0
    %423 = vmatpush1.msra.mxu0 %v229
    %424 = vmatprep.subr.mxu0 0.0
    %425 = vmatpush1.msra.mxu0 %v228
    %426 = vmatprep.subr.mxu0 0.0
    %427 = vmatpush2.msra.mxu0 0.0
    %428 = vmatprep.subr.mxu0 0.0
    %429 = vmatpush2.msra.mxu0 0.0
    %430 = vmatprep.subr.mxu0 0.0
    %431 = vmatpush2.msra.mxu0 0.0
    %432 = vmatprep.subr.mxu0 0.0
    %433 = vmatpush2.msra.mxu0 0.0
    %434 = vmatprep.subr.mxu0 0.0
    %435 = vmatpush2.msra.mxu0 0.0
    %436 = vmatprep.subr.mxu0 0.0
    %437 = vmatpush2.msra.mxu0 0.0
    %438 = vmatprep.subr.mxu0 0.0
    %439 = vmatpush2.msra.mxu0 0.0
    %440 = vmatprep.subr.mxu0 0.0
    %441 = vmatpush2.msra.mxu0 0.0
    %442 = vmatprep.subr.mxu0 0.0
    %443 = vmatpush2.msra.mxu0 0.0
    %444 = vmatprep.subr.mxu0 0.0
    %445 = vmatpush2.msra.mxu0 0.0
    %446 = vmatprep.subr.mxu0 0.0
    %447 = vmatpush2.msra.mxu0 0.0
    %448 = vmatprep.subr.mxu0 0.0
    %449 = vmatpush2.msra.mxu0 0.0
    %450 = vmatprep.subr.mxu0 0.0
    %451 = vmatpush2.msra.mxu0 0.0
    %452 = vmatprep.subr.mxu0 0.0
    %453 = vmatpush2.msra.mxu0 0.0
    %454 = vmatprep.subr.mxu0 0.0
    %455 = vmatpush2.msra.mxu0 0.0
    %456 = vmatprep.subr.mxu0 0.0
    %457 = vmatpush2.msra.mxu0 0.0
    %458 = vmatprep.mubr.f32.mxu0 0.0
    %459 = vmatmul.mubr.f32.gmra.mxu0 %v391
    %v460 = vpop.f32.mrf.mxu0
    %v461 = vadd.f32 0.0, %v460
    %v462 = vpop.f32.mrf.mxu0
    %463 = vdwg.mxu0
    %v464 = vadd.f32 %v393, %v461
    %v465 = vtanh.pop %v464
    %s466 = scalar_lea.vmem [#allocation3], 24
    %v467 = vld [vmem:[%s466] sm:$0xff]
    %468 = vmatprep.subr.mxu0 0.0
    %469 = vmatpush1.msra.mxu0 %v243
    %470 = vmatprep.subr.mxu0 0.0
    %471 = vmatpush1.msra.mxu0 %v242
    %472 = vmatprep.subr.mxu0 0.0
    %473 = vmatpush1.msra.mxu0 %v241
    %474 = vmatprep.subr.mxu0 0.0
    %475 = vmatpush1.msra.mxu0 %v240
    %476 = vmatprep.subr.mxu0 0.0
    %477 = vmatpush1.msra.mxu0 %v239
    %478 = vmatprep.subr.mxu0 0.0
    %479 = vmatpush1.msra.mxu0 %v238
    %480 = vmatprep.subr.mxu0 0.0
    %481 = vmatpush1.msra.mxu0 %v237
    %482 = vmatprep.subr.mxu0 0.0
    %483 = vmatpush1.msra.mxu0 %v236
    %484 = vmatprep.subr.mxu0 0.0
    %485 = vmatpush1.msra.mxu0 %v235
    %486 = vmatprep.subr.mxu0 0.0
    %487 = vmatpush1.msra.mxu0 %v234
    %488 = vmatprep.subr.mxu0 0.0
    %489 = vmatpush1.msra.mxu0 %v233
    %490 = vmatprep.subr.mxu0 0.0
    %491 = vmatpush1.msra.mxu0 %v232
    %492 = vmatprep.subr.mxu0 0.0
    %493 = vmatpush1.msra.mxu0 %v231
    %494 = vmatprep.subr.mxu0 0.0
    %495 = vmatpush1.msra.mxu0 %v230
    %496 = vmatprep.subr.mxu0 0.0
    %497 = vmatpush1.msra.mxu0 %v229
    %498 = vmatprep.subr.mxu0 0.0
    %499 = vmatpush1.msra.mxu0 %v228
    %500 = vmatprep.subr.mxu0 0.0
    %501 = vmatpush2.msra.mxu0 0.0
    %502 = vmatprep.subr.mxu0 0.0
    %503 = vmatpush2.msra.mxu0 0.0
    %504 = vmatprep.subr.mxu0 0.0
    %505 = vmatpush2.msra.mxu0 0.0
    %506 = vmatprep.subr.mxu0 0.0
    %507 = vmatpush2.msra.mxu0 0.0
    %508 = vmatprep.subr.mxu0 0.0
    %509 = vmatpush2.msra.mxu0 0.0
    %510 = vmatprep.subr.mxu0 0.0
    %511 = vmatpush2.msra.mxu0 0.0
    %512 = vmatprep.subr.mxu0 0.0
    %513 = vmatpush2.msra.mxu0 0.0
    %514 = vmatprep.subr.mxu0 0.0
    %515 = vmatpush2.msra.mxu0 0.0
    %516 = vmatprep.subr.mxu0 0.0
    %517 = vmatpush2.msra.mxu0 0.0
    %518 = vmatprep.subr.mxu0 0.0
    %519 = vmatpush2.msra.mxu0 0.0
    %520 = vmatprep.subr.mxu0 0.0
    %521 = vmatpush2.msra.mxu0 0.0
    %522 = vmatprep.subr.mxu0 0.0
    %523 = vmatpush2.msra.mxu0 0.0
    %524 = vmatprep.subr.mxu0 0.0
    %525 = vmatpush2.msra.mxu0 0.0
    %526 = vmatprep.subr.mxu0 0.0
    %527 = vmatpush2.msra.mxu0 0.0
    %528 = vmatprep.subr.mxu0 0.0
    %529 = vmatpush2.msra.mxu0 0.0
    %530 = vmatprep.subr.mxu0 0.0
    %531 = vmatpush2.msra.mxu0 0.0
    %532 = vmatprep.mubr.f32.mxu0 0.0
    %533 = vmatmul.mubr.f32.gmra.mxu0 %v465
    %v534 = vpop.f32.mrf.mxu0
    %v535 = vadd.f32 0.0, %v534
    %v536 = vpop.f32.mrf.mxu0
    %537 = vdwg.mxu0
    %v538 = vadd.f32 %v467, %v535
    %v539 = vtanh.pop %v538
    %s540 = scalar_lea.vmem [#allocation3], 32
    %v541 = vld [vmem:[%s540] sm:$0xff]
    %542 = vmatprep.subr.mxu0 0.0
    %543 = vmatpush1.msra.mxu0 %v243
    %544 = vmatprep.subr.mxu0 0.0
    %545 = vmatpush1.msra.mxu0 %v242
    %546 = vmatprep.subr.mxu0 0.0
    %547 = vmatpush1.msra.mxu0 %v241
    %548 = vmatprep.subr.mxu0 0.0
    %549 = vmatpush1.msra.mxu0 %v240
    %550 = vmatprep.subr.mxu0 0.0
    %551 = vmatpush1.msra.mxu0 %v239
    %552 = vmatprep.subr.mxu0 0.0
    %553 = vmatpush1.msra.mxu0 %v238
    %554 = vmatprep.subr.mxu0 0.0
    %555 = vmatpush1.msra.mxu0 %v237
    %556 = vmatprep.subr.mxu0 0.0
    %557 = vmatpush1.msra.mxu0 %v236
    %558 = vmatprep.subr.mxu0 0.0
    %559 = vmatpush1.msra.mxu0 %v235
    %560 = vmatprep.subr.mxu0 0.0
    %561 = vmatpush1.msra.mxu0 %v234
    %562 = vmatprep.subr.mxu0 0.0
    %563 = vmatpush1.msra.mxu0 %v233
    %564 = vmatprep.subr.mxu0 0.0
    %565 = vmatpush1.msra.mxu0 %v232
    %566 = vmatprep.subr.mxu0 0.0
    %567 = vmatpush1.msra.mxu0 %v231
    %568 = vmatprep.subr.mxu0 0.0
    %569 = vmatpush1.msra.mxu0 %v230
    %570 = vmatprep.subr.mxu0 0.0
    %571 = vmatpush1.msra.mxu0 %v229
    %572 = vmatprep.subr.mxu0 0.0
    %573 = vmatpush1.msra.mxu0 %v228
    %574 = vmatprep.subr.mxu0 0.0
    %575 = vmatpush2.msra.mxu0 0.0
    %576 = vmatprep.subr.mxu0 0.0
    %577 = vmatpush2.msra.mxu0 0.0
    %578 = vmatprep.subr.mxu0 0.0
    %579 = vmatpush2.msra.mxu0 0.0
    %580 = vmatprep.subr.mxu0 0.0
    %581 = vmatpush2.msra.mxu0 0.0
    %582 = vmatprep.subr.mxu0 0.0
    %583 = vmatpush2.msra.mxu0 0.0
    %584 = vmatprep.subr.mxu0 0.0
    %585 = vmatpush2.msra.mxu0 0.0
    %586 = vmatprep.subr.mxu0 0.0
    %587 = vmatpush2.msra.mxu0 0.0
    %588 = vmatprep.subr.mxu0 0.0
    %589 = vmatpush2.msra.mxu0 0.0
    %590 = vmatprep.subr.mxu0 0.0
    %591 = vmatpush2.msra.mxu0 0.0
    %592 = vmatprep.subr.mxu0 0.0
    %593 = vmatpush2.msra.mxu0 0.0
    %594 = vmatprep.subr.mxu0 0.0
    %595 = vmatpush2.msra.mxu0 0.0
    %596 = vmatprep.subr.mxu0 0.0
    %597 = vmatpush2.msra.mxu0 0.0
    %598 = vmatprep.subr.mxu0 0.0
    %599 = vmatpush2.msra.mxu0 0.0
    %600 = vmatprep.subr.mxu0 0.0
    %601 = vmatpush2.msra.mxu0 0.0
    %602 = vmatprep.subr.mxu0 0.0
    %603 = vmatpush2.msra.mxu0 0.0
    %604 = vmatprep.subr.mxu0 0.0
    %605 = vmatpush2.msra.mxu0 0.0
    %606 = vmatprep.mubr.f32.mxu0 0.0
    %607 = vmatmul.mubr.f32.gmra.mxu0 %v539
    %v608 = vpop.f32.mrf.mxu0
    %v609 = vadd.f32 0.0, %v608
    %v610 = vpop.f32.mrf.mxu0
    %611 = vdwg.mxu0
    %v612 = vadd.f32 %v541, %v609
    %v613 = vtanh.pop %v612
    %s614 = scalar_lea.vmem [#allocation3], 40
    %v615 = vld [vmem:[%s614] sm:$0xff]
    %616 = vmatprep.subr.mxu0 0.0
    %617 = vmatpush1.msra.mxu0 %v243
    %618 = vmatprep.subr.mxu0 0.0
    %619 = vmatpush1.msra.mxu0 %v242
    %620 = vmatprep.subr.mxu0 0.0
    %621 = vmatpush1.msra.mxu0 %v241
    %622 = vmatprep.subr.mxu0 0.0
    %623 = vmatpush1.msra.mxu0 %v240
    %624 = vmatprep.subr.mxu0 0.0
    %625 = vmatpush1.msra.mxu0 %v239
    %626 = vmatprep.subr.mxu0 0.0
    %627 = vmatpush1.msra.mxu0 %v238
    %628 = vmatprep.subr.mxu0 0.0
    %629 = vmatpush1.msra.mxu0 %v237
    %630 = vmatprep.subr.mxu0 0.0
    %631 = vmatpush1.msra.mxu0 %v236
    %632 = vmatprep.subr.mxu0 0.0
    %633 = vmatpush1.msra.mxu0 %v235
    %634 = vmatprep.subr.mxu0 0.0
    %635 = vmatpush1.msra.mxu0 %v234
    %636 = vmatprep.subr.mxu0 0.0
    %637 = vmatpush1.msra.mxu0 %v233
    %638 = vmatprep.subr.mxu0 0.0
    %639 = vmatpush1.msra.mxu0 %v232
    %640 = vmatprep.subr.mxu0 0.0
    %641 = vmatpush1.msra.mxu0 %v231
    %642 = vmatprep.subr.mxu0 0.0
    %643 = vmatpush1.msra.mxu0 %v230
    %644 = vmatprep.subr.mxu0 0.0
    %645 = vmatpush1.msra.mxu0 %v229
    %646 = vmatprep.subr.mxu0 0.0
    %647 = vmatpush1.msra.mxu0 %v228
    %648 = vmatprep.subr.mxu0 0.0
    %649 = vmatpush2.msra.mxu0 0.0
    %650 = vmatprep.subr.mxu0 0.0
    %651 = vmatpush2.msra.mxu0 0.0
    %652 = vmatprep.subr.mxu0 0.0
    %653 = vmatpush2.msra.mxu0 0.0
    %654 = vmatprep.subr.mxu0 0.0
    %655 = vmatpush2.msra.mxu0 0.0
    %656 = vmatprep.subr.mxu0 0.0
    %657 = vmatpush2.msra.mxu0 0.0
    %658 = vmatprep.subr.mxu0 0.0
    %659 = vmatpush2.msra.mxu0 0.0
    %660 = vmatprep.subr.mxu0 0.0
    %661 = vmatpush2.msra.mxu0 0.0
    %662 = vmatprep.subr.mxu0 0.0
    %663 = vmatpush2.msra.mxu0 0.0
    %664 = vmatprep.subr.mxu0 0.0
    %665 = vmatpush2.msra.mxu0 0.0
    %666 = vmatprep.subr.mxu0 0.0
    %667 = vmatpush2.msra.mxu0 0.0
    %668 = vmatprep.subr.mxu0 0.0
    %669 = vmatpush2.msra.mxu0 0.0
    %670 = vmatprep.subr.mxu0 0.0
    %671 = vmatpush2.msra.mxu0 0.0
    %672 = vmatprep.subr.mxu0 0.0
    %673 = vmatpush2.msra.mxu0 0.0
    %674 = vmatprep.subr.mxu0 0.0
    %675 = vmatpush2.msra.mxu0 0.0
    %676 = vmatprep.subr.mxu0 0.0
    %677 = vmatpush2.msra.mxu0 0.0
    %678 = vmatprep.subr.mxu0 0.0
    %679 = vmatpush2.msra.mxu0 0.0
    %680 = vmatprep.mubr.f32.mxu0 0.0
    %681 = vmatmul.mubr.f32.gmra.mxu0 %v613
    %v682 = vpop.f32.mrf.mxu0
    %v683 = vadd.f32 0.0, %v682
    %v684 = vpop.f32.mrf.mxu0
    %685 = vdwg.mxu0
    %v686 = vadd.f32 %v615, %v683
    %v687 = vtanh.pop %v686
    %s688 = scalar_lea.vmem [#allocation3], 48
    %v689 = vld [vmem:[%s688] sm:$0xff]
    %690 = vmatprep.subr.mxu0 0.0
    %691 = vmatpush1.msra.mxu0 %v243
    %692 = vmatprep.subr.mxu0 0.0
    %693 = vmatpush1.msra.mxu0 %v242
    %694 = vmatprep.subr.mxu0 0.0
    %695 = vmatpush1.msra.mxu0 %v241
    %696 = vmatprep.subr.mxu0 0.0
    %697 = vmatpush1.msra.mxu0 %v240
    %698 = vmatprep.subr.mxu0 0.0
    %699 = vmatpush1.msra.mxu0 %v239
    %700 = vmatprep.subr.mxu0 0.0
    %701 = vmatpush1.msra.mxu0 %v238
    %702 = vmatprep.subr.mxu0 0.0
    %703 = vmatpush1.msra.mxu0 %v237
    %704 = vmatprep.subr.mxu0 0.0
    %705 = vmatpush1.msra.mxu0 %v236
    %706 = vmatprep.subr.mxu0 0.0
    %707 = vmatpush1.msra.mxu0 %v235
    %708 = vmatprep.subr.mxu0 0.0
    %709 = vmatpush1.msra.mxu0 %v234
    %710 = vmatprep.subr.mxu0 0.0
    %711 = vmatpush1.msra.mxu0 %v233
    %712 = vmatprep.subr.mxu0 0.0
    %713 = vmatpush1.msra.mxu0 %v232
    %714 = vmatprep.subr.mxu0 0.0
    %715 = vmatpush1.msra.mxu0 %v231
    %716 = vmatprep.subr.mxu0 0.0
    %717 = vmatpush1.msra.mxu0 %v230
    %718 = vmatprep.subr.mxu0 0.0
    %719 = vmatpush1.msra.mxu0 %v229
    %720 = vmatprep.subr.mxu0 0.0
    %721 = vmatpush1.msra.mxu0 %v228
    %722 = vmatprep.subr.mxu0 0.0
    %723 = vmatpush2.msra.mxu0 0.0
    %724 = vmatprep.subr.mxu0 0.0
    %725 = vmatpush2.msra.mxu0 0.0
    %726 = vmatprep.subr.mxu0 0.0
    %727 = vmatpush2.msra.mxu0 0.0
    %728 = vmatprep.subr.mxu0 0.0
    %729 = vmatpush2.msra.mxu0 0.0
    %730 = vmatprep.subr.mxu0 0.0
    %731 = vmatpush2.msra.mxu0 0.0
    %732 = vmatprep.subr.mxu0 0.0
    %733 = vmatpush2.msra.mxu0 0.0
    %734 = vmatprep.subr.mxu0 0.0
    %735 = vmatpush2.msra.mxu0 0.0
    %736 = vmatprep.subr.mxu0 0.0
    %737 = vmatpush2.msra.mxu0 0.0
    %738 = vmatprep.subr.mxu0 0.0
    %739 = vmatpush2.msra.mxu0 0.0
    %740 = vmatprep.subr.mxu0 0.0
    %741 = vmatpush2.msra.mxu0 0.0
    %742 = vmatprep.subr.mxu0 0.0
    %743 = vmatpush2.msra.mxu0 0.0
    %744 = vmatprep.subr.mxu0 0.0
    %745 = vmatpush2.msra.mxu0 0.0
    %746 = vmatprep.subr.mxu0 0.0
    %747 = vmatpush2.msra.mxu0 0.0
    %748 = vmatprep.subr.mxu0 0.0
    %749 = vmatpush2.msra.mxu0 0.0
    %750 = vmatprep.subr.mxu0 0.0
    %751 = vmatpush2.msra.mxu0 0.0
    %752 = vmatprep.subr.mxu0 0.0
    %753 = vmatpush2.msra.mxu0 0.0
    %754 = vmatprep.mubr.f32.mxu0 0.0
    %755 = vmatmul.mubr.f32.gmra.mxu0 %v687
    %v756 = vpop.f32.mrf.mxu0
    %v757 = vadd.f32 0.0, %v756
    %v758 = vpop.f32.mrf.mxu0
    %759 = vdwg.mxu0
    %v760 = vadd.f32 %v689, %v757
    %v761 = vtanh.pop %v760
    %s762 = scalar_lea.vmem [#allocation3], 56
    %v763 = vld [vmem:[%s762] sm:$0xff]
    %764 = vmatprep.subr.mxu0 0.0
    %765 = vmatpush1.msra.mxu0 %v243
    %766 = vmatprep.subr.mxu0 0.0
    %767 = vmatpush1.msra.mxu0 %v242
    %768 = vmatprep.subr.mxu0 0.0
    %769 = vmatpush1.msra.mxu0 %v241
    %770 = vmatprep.subr.mxu0 0.0
    %771 = vmatpush1.msra.mxu0 %v240
    %772 = vmatprep.subr.mxu0 0.0
    %773 = vmatpush1.msra.mxu0 %v239
    %774 = vmatprep.subr.mxu0 0.0
    %775 = vmatpush1.msra.mxu0 %v238
    %776 = vmatprep.subr.mxu0 0.0
    %777 = vmatpush1.msra.mxu0 %v237
    %778 = vmatprep.subr.mxu0 0.0
    %779 = vmatpush1.msra.mxu0 %v236
    %780 = vmatprep.subr.mxu0 0.0
    %781 = vmatpush1.msra.mxu0 %v235
    %782 = vmatprep.subr.mxu0 0.0
    %783 = vmatpush1.msra.mxu0 %v234
    %784 = vmatprep.subr.mxu0 0.0
    %785 = vmatpush1.msra.mxu0 %v233
    %786 = vmatprep.subr.mxu0 0.0
    %787 = vmatpush1.msra.mxu0 %v232
    %788 = vmatprep.subr.mxu0 0.0
    %789 = vmatpush1.msra.mxu0 %v231
    %790 = vmatprep.subr.mxu0 0.0
    %791 = vmatpush1.msra.mxu0 %v230
    %792 = vmatprep.subr.mxu0 0.0
    %793 = vmatpush1.msra.mxu0 %v229
    %794 = vmatprep.subr.mxu0 0.0
    %795 = vmatpush1.msra.mxu0 %v228
    %796 = vmatprep.subr.mxu0 0.0
    %797 = vmatpush2.msra.mxu0 0.0
    %798 = vmatprep.subr.mxu0 0.0
    %799 = vmatpush2.msra.mxu0 0.0
    %800 = vmatprep.subr.mxu0 0.0
    %801 = vmatpush2.msra.mxu0 0.0
    %802 = vmatprep.subr.mxu0 0.0
    %803 = vmatpush2.msra.mxu0 0.0
    %804 = vmatprep.subr.mxu0 0.0
    %805 = vmatpush2.msra.mxu0 0.0
    %806 = vmatprep.subr.mxu0 0.0
    %807 = vmatpush2.msra.mxu0 0.0
    %808 = vmatprep.subr.mxu0 0.0
    %809 = vmatpush2.msra.mxu0 0.0
    %810 = vmatprep.subr.mxu0 0.0
    %811 = vmatpush2.msra.mxu0 0.0
    %812 = vmatprep.subr.mxu0 0.0
    %813 = vmatpush2.msra.mxu0 0.0
    %814 = vmatprep.subr.mxu0 0.0
    %815 = vmatpush2.msra.mxu0 0.0
    %816 = vmatprep.subr.mxu0 0.0
    %817 = vmatpush2.msra.mxu0 0.0
    %818 = vmatprep.subr.mxu0 0.0
    %819 = vmatpush2.msra.mxu0 0.0
    %820 = vmatprep.subr.mxu0 0.0
    %821 = vmatpush2.msra.mxu0 0.0
    %822 = vmatprep.subr.mxu0 0.0
    %823 = vmatpush2.msra.mxu0 0.0
    %824 = vmatprep.subr.mxu0 0.0
    %825 = vmatpush2.msra.mxu0 0.0
    %826 = vmatprep.subr.mxu0 0.0
    %827 = vmatpush2.msra.mxu0 0.0
    %828 = vmatprep.mubr.f32.mxu0 0.0
    %829 = vmatmul.mubr.f32.gmra.mxu0 %v761
    %v830 = vpop.f32.mrf.mxu0
    %v831 = vadd.f32 0.0, %v830
    %v832 = vpop.f32.mrf.mxu0
    %833 = vdwg.mxu0
    %v834 = vadd.f32 %v763, %v831
    %v835 = vtanh.pop %v834
    %836 = vst [vmem:[#allocation2] sm:$0xff] %v835
    // Predicated region
    $region46: #{tpu_custom_call.1} parent=1 // pred_check
      %p837 = pneg %p79
    $region47: #{tpu_custom_call.1} parent=1 // pred_check_branch
      %839 = sbr.rel (%p837) target = $region49
    $region48: #{tpu_custom_call.1} parent=1 // pred_region
      %v840 = vld [vmem:[#allocation2] sm:$0xff]
      %v841 = vld [vmem:[#allocation10] sm:$0xff]
      %v842 = vld [vmem:[#allocation10 + $0x8] sm:$0xff]
      %v843 = vld [vmem:[#allocation10 + $0x10] sm:$0xff]
      %v844 = vld [vmem:[#allocation10 + $0x18] sm:$0xff]
      %v845 = vld [vmem:[#allocation10 + $0x20] sm:$0xff]
      %v846 = vld [vmem:[#allocation10 + $0x28] sm:$0xff]
      %v847 = vld [vmem:[#allocation10 + $0x30] sm:$0xff]
      %v848 = vld [vmem:[#allocation10 + $0x38] sm:$0xff]
      %v849 = vld [vmem:[#allocation10 + $0x40] sm:$0xff]
      %v850 = vld [vmem:[#allocation10 + $0x48] sm:$0xff]
      %v851 = vld [vmem:[#allocation10 + $0x50] sm:$0xff]
      %v852 = vld [vmem:[#allocation10 + $0x58] sm:$0xff]
      %v853 = vld [vmem:[#allocation10 + $0x60] sm:$0xff]
      %v854 = vld [vmem:[#allocation10 + $0x68] sm:$0xff]
      %v855 = vld [vmem:[#allocation10 + $0x70] sm:$0xff]
      %v856 = vld [vmem:[#allocation10 + $0x78] sm:$0xff]
      %v857 = vld [vmem:[%s5] sm:$0x1]
      %v859 = vlaneseq
      %v860 = vshrl.u32 %v859, 7
      %v861 = vsub.s32 0, %v860
      %v862 = vrot.slane %v857, %v861
      %864 = vmatprep.subr.mxu0 0.0
      %865 = vmatpush1.msra.mxu0 %v856
      %866 = vmatprep.subr.mxu0 0.0
      %867 = vmatpush1.msra.mxu0 %v855
      %868 = vmatprep.subr.mxu0 0.0
      %869 = vmatpush1.msra.mxu0 %v854
      %870 = vmatprep.subr.mxu0 0.0
      %871 = vmatpush1.msra.mxu0 %v853
      %872 = vmatprep.subr.mxu0 0.0
      %873 = vmatpush1.msra.mxu0 %v852
      %874 = vmatprep.subr.mxu0 0.0
      %875 = vmatpush1.msra.mxu0 %v851
      %876 = vmatprep.subr.mxu0 0.0
      %877 = vmatpush1.msra.mxu0 %v850
      %878 = vmatprep.subr.mxu0 0.0
      %879 = vmatpush1.msra.mxu0 %v849
      %880 = vmatprep.subr.mxu0 0.0
      %881 = vmatpush1.msra.mxu0 %v848
      %882 = vmatprep.subr.mxu0 0.0
      %883 = vmatpush1.msra.mxu0 %v847
      %884 = vmatprep.subr.mxu0 0.0
      %885 = vmatpush1.msra.mxu0 %v846
      %886 = vmatprep.subr.mxu0 0.0
      %887 = vmatpush1.msra.mxu0 %v845
      %888 = vmatprep.subr.mxu0 0.0
      %889 = vmatpush1.msra.mxu0 %v844
      %890 = vmatprep.subr.mxu0 0.0
      %891 = vmatpush1.msra.mxu0 %v843
      %892 = vmatprep.subr.mxu0 0.0
      %893 = vmatpush1.msra.mxu0 %v842
      %894 = vmatprep.subr.mxu0 0.0
      %895 = vmatpush1.msra.mxu0 %v841
      %896 = vmatprep.subr.mxu0 0.0
      %897 = vmatpush2.msra.mxu0 0.0
      %898 = vmatprep.subr.mxu0 0.0
      %899 = vmatpush2.msra.mxu0 0.0
      %900 = vmatprep.subr.mxu0 0.0
      %901 = vmatpush2.msra.mxu0 0.0
      %902 = vmatprep.subr.mxu0 0.0
      %903 = vmatpush2.msra.mxu0 0.0
      %904 = vmatprep.subr.mxu0 0.0
      %905 = vmatpush2.msra.mxu0 0.0
      %906 = vmatprep.subr.mxu0 0.0
      %907 = vmatpush2.msra.mxu0 0.0
      %908 = vmatprep.subr.mxu0 0.0
      %909 = vmatpush2.msra.mxu0 0.0
      %910 = vmatprep.subr.mxu0 0.0
      %911 = vmatpush2.msra.mxu0 0.0
      %912 = vmatprep.subr.mxu0 0.0
      %913 = vmatpush2.msra.mxu0 0.0
      %914 = vmatprep.subr.mxu0 0.0
      %915 = vmatpush2.msra.mxu0 0.0
      %916 = vmatprep.subr.mxu0 0.0
      %917 = vmatpush2.msra.mxu0 0.0
      %918 = vmatprep.subr.mxu0 0.0
      %919 = vmatpush2.msra.mxu0 0.0
      %920 = vmatprep.subr.mxu0 0.0
      %921 = vmatpush2.msra.mxu0 0.0
      %922 = vmatprep.subr.mxu0 0.0
      %923 = vmatpush2.msra.mxu0 0.0
      %924 = vmatprep.subr.mxu0 0.0
      %925 = vmatpush2.msra.mxu0 0.0
      %926 = vmatprep.subr.mxu0 0.0
      %927 = vmatpush2.msra.mxu0 0.0
      %928 = vmatprep.mubr.f32.mxu0 0.0
      %929 = vmatmul.mubr.f32.gmra.mxu0 %v840
      %v930 = vpop.f32.mrf.mxu0
      %v931 = vadd.f32 %v862, %v930
      %v932 = vpop.f32.mrf.mxu0
      %933 = vdwg.mxu0
      %934 = vst [vmem:[#allocation12] sm:$0xff] %v931
    $region49: #{tpu_custom_call.1} parent=1 // pred_fallthru
      _
    // Predicated region
    $region50: #{tpu_custom_call.1} parent=1 // pred_check
      _
    $region51: #{tpu_custom_call.1} parent=1 // pred_check_branch
      %936 = sbr.rel (0) target = $region53
    $region52: #{tpu_custom_call.1} parent=1 // pred_region
      %s938 = ssub.s32 128, 128
      %939 = vsyncadd [#allocation6], %s938
      %s941 = sshll.u32 [#allocation12], 4
      %s942 = int_to_ptr.vmem [resolvable:$true] %s941
      %944 = dma.vmem_to_hbm [thread:$0]  %s942, 128, %s6, [#allocation6]
    $region53: #{tpu_custom_call.1} parent=1 // pred_fallthru
      _
    // Predicated region
    $region54: #{tpu_custom_call.1} parent=1 // pred_check
      _
    $region55: #{tpu_custom_call.1} parent=1 // pred_check_branch
      %946 = sbr.rel (0) target = $region57
    $region56: #{tpu_custom_call.1} parent=1 // pred_region
      %947 = dma.done [#allocation6], 128
    $region57: #{tpu_custom_call.1} parent=1 // pred_fallthru
      _
    %948 = vsyncpa [#allocation5], 1
    %949 = vsyncpa [#allocation8], 1
    %950 = vsyncpa [#allocation11], 1
    %951 = vsyncpa [#allocation6], 1

</llo_original>
